<compile_context>
chip_gen: v6e
topology: v6e:2x2x1
jax: 0.10.0
libtpu: 0.0.40
codegen_flags: <defaults>
</compile_context>

<pallas_src>
import functools

import jax
import jax.numpy as jnp
from jax.experimental import pallas as pl
from jax.experimental.pallas import tpu as pltpu


def _round_up(n, m):
    return ((n + m - 1) // m) * m


def _bnn_kernel(num_layers, x_ref, *refs):
    """refs = (w1, b1, ..., w_L, b_L, w_out, b_out, out_ref).

    Transposed layout: x_ref is (in_dim, TB); w_i is (d_out, d_in);
    b_i is (d_out, 1); out_ref is (1, TB) — batch on the lane axis.
    """
    out_ref = refs[-1]
    param_refs = refs[:-1]

    h = x_ref[...]  # (in_dim, TB)
    # Hidden layers: Linear + ReLU, all with batch on the lane (N) axis.
    for layer in range(num_layers):
        w = param_refs[2 * layer][...]      # (d_out, d_in)
        b = param_refs[2 * layer + 1][...]  # (d_out, 1)
        h = jnp.dot(w, h, preferred_element_type=jnp.float32) + b
        h = jnp.maximum(h, 0.0)
    # Output head: Linear + sigmoid -> risk score in (0, 1), lane-dense store.
    w_o = param_refs[2 * num_layers][...]       # (1, hidden)
    b_o = param_refs[2 * num_layers + 1][...]   # (1, 1)
    logit = jnp.dot(w_o, h, preferred_element_type=jnp.float32) + b_o
    out_ref[...] = jax.nn.sigmoid(logit)        # (1, TB)


def bayesian_nn_forward(x, params, num_layers, *, max_tile=512):
    """x: [B, in_dim] f32. params: flat list [w1, b1, ..., w_out, b_out]
    with transposed (out, in) weights and (out, 1) biases."""
    batch, in_dim = x.shape

    # Batch tile: multiple of 128 (lane width), capped for VMEM headroom.
    tb = min(max_tile, _round_up(batch, 128))
    b_pad = _round_up(batch, tb)
    n_tiles = b_pad // tb

    # Zero-pad batch so every tile is full (no masked loads/stores), then
    # transpose so batch sits on the lane axis.
    x_t = jnp.pad(x, ((0, b_pad - batch), (0, 0))).T  # (in_dim, b_pad)

    kernel = functools.partial(_bnn_kernel, num_layers)

    in_specs = [pl.BlockSpec((in_dim, tb), lambda i: (0, i))]
    # Params: same block every grid step -> DMA'd once, resident in VMEM.
    # NOTE(synk): could be packed into one flat buffer to cut per-ref DMA
    # descriptors; left separate since each is tiny at these shapes.
    for p in params:
        in_specs.append(pl.BlockSpec(p.shape, lambda i: (0, 0)))

    out = pl.pallas_call(
        kernel,
        out_shape=jax.ShapeDtypeStruct((1, b_pad), jnp.float32),
        grid=(n_tiles,),
        in_specs=in_specs,
        out_specs=pl.BlockSpec((1, tb), lambda i: (0, i)),
        compiler_params=pltpu.CompilerParams(
            dimension_semantics=("parallel",),
            vmem_limit_bytes=32 * 1024 * 1024,
        ),
    )(x_t, *params)

    # (1, b_pad) -> (B, 1): drop padding, restore module's output shape.
    return out[0, :batch].reshape(batch, 1)


def init_bayesian_params(key, in_dim, hidden_dim, num_layers):
    """Deterministic Bayesian weight sampling: W = mu + softplus(rho) * eps.

    Weights are stored transposed as (d_out, d_in); biases as (d_out, 1).
    """
    dims = [in_dim] + [hidden_dim] * num_layers + [1]
    params = []
    for i in range(len(dims) - 1):
        d_in, d_out = dims[i], dims[i + 1]
        key, k_mu, k_eps_w, k_eps_b = jax.random.split(key, 4)
        w_mu = jax.random.normal(k_mu, (d_out, d_in), jnp.float32) * 0.1
        w_rho = jnp.full((d_out, d_in), -3.0, jnp.float32)  # small sigma
        b_mu = jnp.zeros((d_out, 1), jnp.float32)
        b_rho = jnp.full((d_out, 1), -3.0, jnp.float32)
        eps_w = jax.random.normal(k_eps_w, (d_out, d_in), jnp.float32)
        eps_b = jax.random.normal(k_eps_b, (d_out, 1), jnp.float32)
        w = w_mu + jax.nn.softplus(w_rho) * eps_w
        b = b_mu + jax.nn.softplus(b_rho) * eps_b
        params += [w, b]
    return params


class AccountRiskAssessment:
    """JAX/Pallas port of the PyTorch AccountRiskAssessment module."""

    def __init__(self, num_layers, hidden_dim, in_dim=2, key=None):
        self.num_layers = num_layers
        self.hidden_dim = hidden_dim
        if key is None:
            key = jax.random.PRNGKey(0)
        self.params = init_bayesian_params(key, in_dim, hidden_dim, num_layers)

    def __call__(self, x):
        x = jnp.asarray(x, jnp.float32)
        return bayesian_nn_forward(x, self.params, self.num_layers)


if __name__ == "__main__":
    # data = torch.tensor([[1, 2], [3, 4], [5, 6]])  -> shape [3, 2]
    data = jnp.array([[1, 2], [3, 4], [5, 6]], dtype=jnp.float32)

    model = AccountRiskAssessment(num_layers=2, hidden_dim=16,
                                  in_dim=data.shape[1],
                                  key=jax.random.PRNGKey(0))

    risk_score = model(data)
    risk_score = jax.block_until_ready(risk_score)

    assert risk_score.shape == (3, 1)
    assert bool(jnp.all(jnp.isfinite(risk_score)))
    assert bool(jnp.all((risk_score > 0.0) & (risk_score < 1.0)))
    print("KERNEL_OK")
</pallas_src>

<mosaic_0001>
module attributes {stable_mosaic.version = 11 : i64} {
  func.func @_bnn_kernel(%arg0: i32, %arg1: memref<2x128xf32, #tpu.memory_space<vmem>>, %arg2: memref<16x2xf32, #tpu.memory_space<vmem>>, %arg3: memref<16x1xf32, #tpu.memory_space<vmem>>, %arg4: memref<16x16xf32, #tpu.memory_space<vmem>>, %arg5: memref<16x1xf32, #tpu.memory_space<vmem>>, %arg6: memref<1x16xf32, #tpu.memory_space<vmem>>, %arg7: memref<1x1xf32, #tpu.memory_space<vmem>>, %arg8: memref<1x128xf32, #tpu.memory_space<vmem>>) attributes {dimension_semantics = [#tpu.dimension_semantics<parallel>], iteration_bounds = array<i64: 1>, scalar_prefetch = 0 : i64, scratch_operands = 0 : i64, tpu.core_type = #tpu.core_type<tc>, window_params = [{transform_indices = @transform_0, window_bounds = array<i64: 2, 128>}, {pipeline_mode = #tpu.pipeline_mode<synchronous>, transform_indices = @transform_1, window_bounds = array<i64: 16, 2>}, {pipeline_mode = #tpu.pipeline_mode<synchronous>, transform_indices = @transform_2, window_bounds = array<i64: 16, 1>}, {pipeline_mode = #tpu.pipeline_mode<synchronous>, transform_indices = @transform_3, window_bounds = array<i64: 16, 16>}, {pipeline_mode = #tpu.pipeline_mode<synchronous>, transform_indices = @transform_4, window_bounds = array<i64: 16, 1>}, {pipeline_mode = #tpu.pipeline_mode<synchronous>, transform_indices = @transform_5, window_bounds = array<i64: 1, 16>}, {pipeline_mode = #tpu.pipeline_mode<synchronous>, transform_indices = @transform_6, window_bounds = array<i64: 1, 1>}, {transform_indices = @transform_7, window_bounds = array<i64: 1, 128>}]} {
    %c0 = arith.constant 0 : index
    %c0_0 = arith.constant 0 : index
    %0 = vector.load %arg1[%c0, %c0_0] : memref<2x128xf32, #tpu.memory_space<vmem>>, vector<2x128xf32>
    %c0_1 = arith.constant 0 : index
    %c0_2 = arith.constant 0 : index
    %1 = vector.load %arg2[%c0_1, %c0_2] : memref<16x2xf32, #tpu.memory_space<vmem>>, vector<16x2xf32>
    %c0_3 = arith.constant 0 : index
    %c0_4 = arith.constant 0 : index
    %2 = vector.load %arg3[%c0_3, %c0_4] : memref<16x1xf32, #tpu.memory_space<vmem>>, vector<16x1xf32>
    %cst = arith.constant dense<0.000000e+00> : vector<16x128xf32>
    %3 = tpu.matmul %1, %0, %cst {dimension_numbers = #tpu.dot_dimension_numbers<[1], [0], [0], [1], [0, 0, 1, 1], [], []>} : vector<16x2xf32>, vector<2x128xf32>, vector<16x128xf32> -> vector<16x128xf32>
    %4 = vector.broadcast %2 : vector<16x1xf32> to vector<16x128xf32>
    %5 = arith.addf %3, %4 : vector<16x128xf32>
    %cst_5 = arith.constant 0.000000e+00 : f32
    %6 = vector.broadcast %cst_5 : f32 to vector<16x128xf32>
    %7 = arith.maximumf %5, %6 : vector<16x128xf32>
    %c0_6 = arith.constant 0 : index
    %c0_7 = arith.constant 0 : index
    %8 = vector.load %arg4[%c0_6, %c0_7] : memref<16x16xf32, #tpu.memory_space<vmem>>, vector<16x16xf32>
    %c0_8 = arith.constant 0 : index
    %c0_9 = arith.constant 0 : index
    %9 = vector.load %arg5[%c0_8, %c0_9] : memref<16x1xf32, #tpu.memory_space<vmem>>, vector<16x1xf32>
    %cst_10 = arith.constant dense<0.000000e+00> : vector<16x128xf32>
    %10 = tpu.matmul %8, %7, %cst_10 {dimension_numbers = #tpu.dot_dimension_numbers<[1], [0], [0], [1], [0, 0, 1, 1], [], []>} : vector<16x16xf32>, vector<16x128xf32>, vector<16x128xf32> -> vector<16x128xf32>
    %11 = vector.broadcast %9 : vector<16x1xf32> to vector<16x128xf32>
    %12 = arith.addf %10, %11 : vector<16x128xf32>
    %cst_11 = arith.constant 0.000000e+00 : f32
    %13 = vector.broadcast %cst_11 : f32 to vector<16x128xf32>
    %14 = arith.maximumf %12, %13 : vector<16x128xf32>
    %c0_12 = arith.constant 0 : index
    %c0_13 = arith.constant 0 : index
    %15 = vector.load %arg6[%c0_12, %c0_13] : memref<1x16xf32, #tpu.memory_space<vmem>>, vector<1x16xf32>
    %c0_14 = arith.constant 0 : index
    %c0_15 = arith.constant 0 : index
    %16 = vector.load %arg7[%c0_14, %c0_15] : memref<1x1xf32, #tpu.memory_space<vmem>>, vector<1x1xf32>
    %cst_16 = arith.constant dense<0.000000e+00> : vector<1x128xf32>
    %17 = tpu.matmul %15, %14, %cst_16 {dimension_numbers = #tpu.dot_dimension_numbers<[1], [0], [0], [1], [0, 0, 1, 1], [], []>} : vector<1x16xf32>, vector<16x128xf32>, vector<1x128xf32> -> vector<1x128xf32>
    %18 = vector.broadcast %16 : vector<1x1xf32> to vector<1x128xf32>
    %19 = arith.addf %17, %18 : vector<1x128xf32>
    %20 = arith.negf %19 : vector<1x128xf32>
    %21 = math.exp %20 : vector<1x128xf32>
    %cst_17 = arith.constant 1.000000e+00 : f32
    %22 = vector.broadcast %cst_17 : f32 to vector<1x128xf32>
    %23 = arith.addf %22, %21 : vector<1x128xf32>
    %24 = arith.divf %22, %23 : vector<1x128xf32>
    %c0_18 = arith.constant 0 : index
    %c0_19 = arith.constant 0 : index
    %25 = vector.load %arg8[%c0_18, %c0_19] : memref<1x128xf32, #tpu.memory_space<vmem>>, vector<1x128xf32>
    tpu.vector_store %arg8[%c0_18, %c0_19], %24 {strides = array<i32>} : memref<1x128xf32, #tpu.memory_space<vmem>>, vector<1x128xf32>,
    return
  }
  func.func @transform_0(%arg0: i32) -> (i32, i32) {
    %c0_i32 = arith.constant 0 : i32
    %c0_i32_0 = arith.constant 0 : i32
    return %c0_i32, %arg0 : i32, i32
  }
  func.func @transform_1(%arg0: i32) -> (i32, i32) {
    %c0_i32 = arith.constant 0 : i32
    %c0_i32_0 = arith.constant 0 : i32
    %c0_i32_1 = arith.constant 0 : i32
    return %c0_i32, %c0_i32_0 : i32, i32
  }
  func.func @transform_2(%arg0: i32) -> (i32, i32) {
    %c0_i32 = arith.constant 0 : i32
    %c0_i32_0 = arith.constant 0 : i32
    %c0_i32_1 = arith.constant 0 : i32
    return %c0_i32, %c0_i32_0 : i32, i32
  }
  func.func @transform_3(%arg0: i32) -> (i32, i32) {
    %c0_i32 = arith.constant 0 : i32
    %c0_i32_0 = arith.constant 0 : i32
    %c0_i32_1 = arith.constant 0 : i32
    return %c0_i32, %c0_i32_0 : i32, i32
  }
  func.func @transform_4(%arg0: i32) -> (i32, i32) {
    %c0_i32 = arith.constant 0 : i32
    %c0_i32_0 = arith.constant 0 : i32
    %c0_i32_1 = arith.constant 0 : i32
    return %c0_i32, %c0_i32_0 : i32, i32
  }
  func.func @transform_5(%arg0: i32) -> (i32, i32) {
    %c0_i32 = arith.constant 0 : i32
    %c0_i32_0 = arith.constant 0 : i32
    %c0_i32_1 = arith.constant 0 : i32
    return %c0_i32, %c0_i32_0 : i32, i32
  }
  func.func @transform_6(%arg0: i32) -> (i32, i32) {
    %c0_i32 = arith.constant 0 : i32
    %c0_i32_0 = arith.constant 0 : i32
    %c0_i32_1 = arith.constant 0 : i32
    return %c0_i32, %c0_i32_0 : i32, i32
  }
  func.func @transform_7(%arg0: i32) -> (i32, i32) {
    %c0_i32 = arith.constant 0 : i32
    %c0_i32_0 = arith.constant 0 : i32
    return %c0_i32, %arg0 : i32, i32
  }
}

</mosaic_0001>

<llo_original>
// kernel: tpu_custom_call.1
$region0: #{tpu_custom_call.1}
  #allocation0 [shape = 'u32[]', space=smem, size = 0x4, offset = 0x4, fixed_abs, tag = 'smem constant byte address 0x4 - core index']
  #allocation1 [shape = 'u32[144,128]{1,0:T(1,128)}', space=vmem, size = 0x12000, scoped, tag = 'internal scratch']
  #allocation2 [shape = 'f32[1,1]{1,0:T(1,128)S(1)}', space=vmem, size = 0x200, scoped, tag = 'scoped memory for tpu_custom_call.1']
  %s0 = inlined_call_operand.vmem [shape: f32[2,128], index: 0, kind: input, shape index: {}]
  %s1 = inlined_call_operand.vmem [shape: f32[16,2], index: 1, kind: input, shape index: {}]
  %s2 = inlined_call_operand.vmem [shape: f32[16,1], index: 2, kind: input, shape index: {}]
  %s3 = inlined_call_operand.vmem [shape: f32[16,16], index: 3, kind: input, shape index: {}]
  %s4 = inlined_call_operand.vmem [shape: f32[16,1], index: 4, kind: input, shape index: {}]
  %s5 = inlined_call_operand.vmem [shape: f32[1,16], index: 5, kind: input, shape index: {}]
  %s6 = inlined_call_operand.<no memory space> [shape: f32[1,1], index: 6, kind: input, shape index: {}]
  %s7 = inlined_call_operand.hbm [shape: f32[1,128], index: 7, kind: output, shape index: {}]
  %s8 = sld [smem:[#allocation0]]
  $region38: #{tpu_custom_call.1} parent=0
    _
  %s10 = ssub.s32 1, %s8
  %s11 = scalar_select 0, %s10, %s8
  %v12 = vstv %s6
  %13 = vst [vmem:[#allocation2] sm:$0x1] %v12
  $region1: #{tpu_custom_call.1} parent=0
    #allocation3 [shape = 'u8[512]{0}', space=vmem, size = 0x400, scoped, tag = 'output window, operand 0, single buffered']
    #allocation4 [shape = 's32[1]{0}', space=sflag, size = 0x4, scoped, tag = 'scoped memory for tpu_custom_call.1']
    %14 = vsyncpa [#allocation4], 0
    // Predicated region
    $region2: #{tpu_custom_call.1} parent=1 // pred_check
      _
    $region3: #{tpu_custom_call.1} parent=1 // pred_check_branch
      %16 = sbr.rel (0) target = $region5
    $region4: #{tpu_custom_call.1} parent=1 // pred_region
      _
    $region5: #{tpu_custom_call.1} parent=1 // pred_fallthru
      _
    // Predicated region
    $region6: #{tpu_custom_call.1} parent=1 // pred_check
      _
    $region7: #{tpu_custom_call.1} parent=1 // pred_check_branch
      %18 = sbr.rel (0) target = $region9
    $region8: #{tpu_custom_call.1} parent=1 // pred_region
      _
    $region9: #{tpu_custom_call.1} parent=1 // pred_fallthru
      _
    // Predicated region
    $region10: #{tpu_custom_call.1} parent=1 // pred_check
      _
    $region11: #{tpu_custom_call.1} parent=1 // pred_check_branch
      %20 = sbr.rel (0) target = $region13
    $region12: #{tpu_custom_call.1} parent=1 // pred_region
      _
    $region13: #{tpu_custom_call.1} parent=1 // pred_fallthru
      _
    // Predicated region
    $region14: #{tpu_custom_call.1} parent=1 // pred_check
      _
    $region15: #{tpu_custom_call.1} parent=1 // pred_check_branch
      %22 = sbr.rel (0) target = $region17
    $region16: #{tpu_custom_call.1} parent=1 // pred_region
      _
    $region17: #{tpu_custom_call.1} parent=1 // pred_fallthru
      _
    // Predicated region
    $region18: #{tpu_custom_call.1} parent=1 // pred_check
      _
    $region19: #{tpu_custom_call.1} parent=1 // pred_check_branch
      %24 = sbr.rel (0) target = $region21
    $region20: #{tpu_custom_call.1} parent=1 // pred_region
      _
    $region21: #{tpu_custom_call.1} parent=1 // pred_fallthru
      _
    // Predicated region
    $region22: #{tpu_custom_call.1} parent=1 // pred_check
      _
    $region23: #{tpu_custom_call.1} parent=1 // pred_check_branch
      %26 = sbr.rel (0) target = $region25
    $region24: #{tpu_custom_call.1} parent=1 // pred_region
      _
    $region25: #{tpu_custom_call.1} parent=1 // pred_fallthru
      _
    // Predicated region
    $region26: #{tpu_custom_call.1} parent=1 // pred_check
      _
    $region27: #{tpu_custom_call.1} parent=1 // pred_check_branch
      %28 = sbr.rel (0) target = $region29
    $region28: #{tpu_custom_call.1} parent=1 // pred_region
      _
    $region29: #{tpu_custom_call.1} parent=1 // pred_fallthru
      _
    %v29 = vld [vmem:[%s0] sm:$0x3]
    %v30 = vld [vmem:[%s1] sm:$0xff]
    %v31 = vld [vmem:[%s1 + $0x8] sm:$0xff]
    %v32 = vld [vmem:[%s2] sm:$0xff]
    %v33 = vld [vmem:[%s2 + $0x8] sm:$0xff]
    %35 = vset.pattern.permute.xlu0 0
    %36 = vperm.xlu0 %35, %v32
    %v37 = vpop.permute.xlu0 %36
    %40 = vset.pattern.permute.xlu0 0
    %41 = vperm.xlu0 %40, %v33
    %v42 = vpop.permute.xlu0 %41
    %vm44 = vcmask 15360
    %v46 = vsel %vm44, %v30, 0
    %v49 = vsel %vm44, %v31, 0
    %vm51 = vcmask 1041408
    %v53 = vsel %vm51, %v29, 0
    %55 = vmatprep.subr.mxu0 0.0
    %56 = vmatpush1.msra.mxu0 0.0
    %57 = vmatprep.subr.mxu0 0.0
    %58 = vmatpush1.msra.mxu0 0.0
    %59 = vmatprep.subr.mxu0 0.0
    %60 = vmatpush1.msra.mxu0 0.0
    %61 = vmatprep.subr.mxu0 0.0
    %62 = vmatpush1.msra.mxu0 0.0
    %63 = vmatprep.subr.mxu0 0.0
    %64 = vmatpush1.msra.mxu0 0.0
    %65 = vmatprep.subr.mxu0 0.0
    %66 = vmatpush1.msra.mxu0 0.0
    %67 = vmatprep.subr.mxu0 0.0
    %68 = vmatpush1.msra.mxu0 0.0
    %69 = vmatprep.subr.mxu0 0.0
    %70 = vmatpush1.msra.mxu0 0.0
    %71 = vmatprep.subr.mxu0 0.0
    %72 = vmatpush1.msra.mxu0 0.0
    %73 = vmatprep.subr.mxu0 0.0
    %74 = vmatpush1.msra.mxu0 0.0
    %75 = vmatprep.subr.mxu0 0.0
    %76 = vmatpush1.msra.mxu0 0.0
    %77 = vmatprep.subr.mxu0 0.0
    %78 = vmatpush1.msra.mxu0 0.0
    %79 = vmatprep.subr.mxu0 0.0
    %80 = vmatpush1.msra.mxu0 0.0
    %81 = vmatprep.subr.mxu0 0.0
    %82 = vmatpush1.msra.mxu0 0.0
    %83 = vmatprep.subr.mxu0 0.0
    %84 = vmatpush1.msra.mxu0 0.0
    %85 = vmatprep.subr.mxu0 0.0
    %86 = vmatpush1.msra.mxu0 %v53
    %87 = vmatprep.subr.mxu0 0.0
    %88 = vmatpush2.msra.mxu0 0.0
    %89 = vmatprep.subr.mxu0 0.0
    %90 = vmatpush2.msra.mxu0 0.0
    %91 = vmatprep.subr.mxu0 0.0
    %92 = vmatpush2.msra.mxu0 0.0
    %93 = vmatprep.subr.mxu0 0.0
    %94 = vmatpush2.msra.mxu0 0.0
    %95 = vmatprep.subr.mxu0 0.0
    %96 = vmatpush2.msra.mxu0 0.0
    %97 = vmatprep.subr.mxu0 0.0
    %98 = vmatpush2.msra.mxu0 0.0
    %99 = vmatprep.subr.mxu0 0.0
    %100 = vmatpush2.msra.mxu0 0.0
    %101 = vmatprep.subr.mxu0 0.0
    %102 = vmatpush2.msra.mxu0 0.0
    %103 = vmatprep.subr.mxu0 0.0
    %104 = vmatpush2.msra.mxu0 0.0
    %105 = vmatprep.subr.mxu0 0.0
    %106 = vmatpush2.msra.mxu0 0.0
    %107 = vmatprep.subr.mxu0 0.0
    %108 = vmatpush2.msra.mxu0 0.0
    %109 = vmatprep.subr.mxu0 0.0
    %110 = vmatpush2.msra.mxu0 0.0
    %111 = vmatprep.subr.mxu0 0.0
    %112 = vmatpush2.msra.mxu0 0.0
    %113 = vmatprep.subr.mxu0 0.0
    %114 = vmatpush2.msra.mxu0 0.0
    %115 = vmatprep.subr.mxu0 0.0
    %116 = vmatpush2.msra.mxu0 0.0
    %117 = vmatprep.subr.mxu0 0.0
    %118 = vmatpush2.msra.mxu0 0.0
    %119 = vmatprep.mubr.f32.mxu0 0.0
    %120 = vmatmul.mubr.f32.gmra.mxu0 %v46
    %v121 = vpop.f32.mrf.mxu0
    %v122 = vadd.f32 %v37, %v121
    %v123 = vpop.f32.mrf.mxu0
    %124 = vmatprep.mubr.f32.mxu0 0.0
    %125 = vmatmul.mubr.f32.gmra.mxu0 %v49
    %v126 = vpop.f32.mrf.mxu0
    %v127 = vadd.f32 %v42, %v126
    %v128 = vpop.f32.mrf.mxu0
    %129 = vdwg.mxu0
    %v130 = vmax.f32 %v122, 0.0
    %v131 = vmax.f32 %v127, 0.0
    %v132 = vld [vmem:[%s3] sm:$0xff]
    %v133 = vld [vmem:[%s3 + $0x8] sm:$0xff]
    %v134 = vld [vmem:[%s4] sm:$0xff]
    %v135 = vld [vmem:[%s4 + $0x8] sm:$0xff]
    %137 = vset.pattern.permute.xlu0 0
    %138 = vperm.xlu0 %137, %v134
    %v139 = vpop.permute.xlu0 %138
    %142 = vset.pattern.permute.xlu0 0
    %143 = vperm.xlu0 %142, %v135
    %v144 = vpop.permute.xlu0 %143
    %vm146 = vcmask 130048
    %v148 = vsel %vm146, %v132, 0
    %v151 = vsel %vm146, %v133, 0
    %153 = vmatprep.subr.mxu0 0.0
    %154 = vmatpush1.msra.mxu0 0.0
    %155 = vmatprep.subr.mxu0 0.0
    %156 = vmatpush1.msra.mxu0 0.0
    %157 = vmatprep.subr.mxu0 0.0
    %158 = vmatpush1.msra.mxu0 0.0
    %159 = vmatprep.subr.mxu0 0.0
    %160 = vmatpush1.msra.mxu0 0.0
    %161 = vmatprep.subr.mxu0 0.0
    %162 = vmatpush1.msra.mxu0 0.0
    %163 = vmatprep.subr.mxu0 0.0
    %164 = vmatpush1.msra.mxu0 0.0
    %165 = vmatprep.subr.mxu0 0.0
    %166 = vmatpush1.msra.mxu0 0.0
    %167 = vmatprep.subr.mxu0 0.0
    %168 = vmatpush1.msra.mxu0 0.0
    %169 = vmatprep.subr.mxu0 0.0
    %170 = vmatpush1.msra.mxu0 0.0
    %171 = vmatprep.subr.mxu0 0.0
    %172 = vmatpush1.msra.mxu0 0.0
    %173 = vmatprep.subr.mxu0 0.0
    %174 = vmatpush1.msra.mxu0 0.0
    %175 = vmatprep.subr.mxu0 0.0
    %176 = vmatpush1.msra.mxu0 0.0
    %177 = vmatprep.subr.mxu0 0.0
    %178 = vmatpush1.msra.mxu0 0.0
    %179 = vmatprep.subr.mxu0 0.0
    %180 = vmatpush1.msra.mxu0 0.0
    %181 = vmatprep.subr.mxu0 0.0
    %182 = vmatpush1.msra.mxu0 %v131
    %183 = vmatprep.subr.mxu0 0.0
    %184 = vmatpush1.msra.mxu0 %v130
    %185 = vmatprep.subr.mxu0 0.0
    %186 = vmatpush2.msra.mxu0 0.0
    %187 = vmatprep.subr.mxu0 0.0
    %188 = vmatpush2.msra.mxu0 0.0
    %189 = vmatprep.subr.mxu0 0.0
    %190 = vmatpush2.msra.mxu0 0.0
    %191 = vmatprep.subr.mxu0 0.0
    %192 = vmatpush2.msra.mxu0 0.0
    %193 = vmatprep.subr.mxu0 0.0
    %194 = vmatpush2.msra.mxu0 0.0
    %195 = vmatprep.subr.mxu0 0.0
    %196 = vmatpush2.msra.mxu0 0.0
    %197 = vmatprep.subr.mxu0 0.0
    %198 = vmatpush2.msra.mxu0 0.0
    %199 = vmatprep.subr.mxu0 0.0
    %200 = vmatpush2.msra.mxu0 0.0
    %201 = vmatprep.subr.mxu0 0.0
    %202 = vmatpush2.msra.mxu0 0.0
    %203 = vmatprep.subr.mxu0 0.0
    %204 = vmatpush2.msra.mxu0 0.0
    %205 = vmatprep.subr.mxu0 0.0
    %206 = vmatpush2.msra.mxu0 0.0
    %207 = vmatprep.subr.mxu0 0.0
    %208 = vmatpush2.msra.mxu0 0.0
    %209 = vmatprep.subr.mxu0 0.0
    %210 = vmatpush2.msra.mxu0 0.0
    %211 = vmatprep.subr.mxu0 0.0
    %212 = vmatpush2.msra.mxu0 0.0
    %213 = vmatprep.subr.mxu0 0.0
    %214 = vmatpush2.msra.mxu0 0.0
    %215 = vmatprep.subr.mxu0 0.0
    %216 = vmatpush2.msra.mxu0 0.0
    %217 = vmatprep.mubr.f32.mxu0 0.0
    %218 = vmatmul.mubr.f32.gmra.mxu0 %v148
    %v219 = vpop.f32.mrf.mxu0
    %v220 = vadd.f32 %v139, %v219
    %v221 = vpop.f32.mrf.mxu0
    %222 = vmatprep.mubr.f32.mxu0 0.0
    %223 = vmatmul.mubr.f32.gmra.mxu0 %v151
    %v224 = vpop.f32.mrf.mxu0
    %v225 = vadd.f32 %v144, %v224
    %v226 = vpop.f32.mrf.mxu0
    %227 = vdwg.mxu0
    %v228 = vmax.f32 %v220, 0.0
    %v229 = vmax.f32 %v225, 0.0
    %v230 = vld [vmem:[%s5] sm:$0x1]
    %v231 = vld [vmem:[#allocation2] sm:$0x1]
    %233 = vset.pattern.permute.xlu0 0
    %234 = vperm.xlu0 %233, %v231
    %v235 = vpop.permute.xlu0 %234
    %v237 = vlaneseq
    %v238 = vshrl.u32 %v237, 7
    %v239 = vsub.s32 0, %v238
    %v240 = vrot.slane %v235, %v239
    %v242 = vsel %vm146, %v230, 0
    %244 = vmatprep.subr.mxu0 0.0
    %245 = vmatpush1.msra.mxu0 0.0
    %246 = vmatprep.subr.mxu0 0.0
    %247 = vmatpush1.msra.mxu0 0.0
    %248 = vmatprep.subr.mxu0 0.0
    %249 = vmatpush1.msra.mxu0 0.0
    %250 = vmatprep.subr.mxu0 0.0
    %251 = vmatpush1.msra.mxu0 0.0
    %252 = vmatprep.subr.mxu0 0.0
    %253 = vmatpush1.msra.mxu0 0.0
    %254 = vmatprep.subr.mxu0 0.0
    %255 = vmatpush1.msra.mxu0 0.0
    %256 = vmatprep.subr.mxu0 0.0
    %257 = vmatpush1.msra.mxu0 0.0
    %258 = vmatprep.subr.mxu0 0.0
    %259 = vmatpush1.msra.mxu0 0.0
    %260 = vmatprep.subr.mxu0 0.0
    %261 = vmatpush1.msra.mxu0 0.0
    %262 = vmatprep.subr.mxu0 0.0
    %263 = vmatpush1.msra.mxu0 0.0
    %264 = vmatprep.subr.mxu0 0.0
    %265 = vmatpush1.msra.mxu0 0.0
    %266 = vmatprep.subr.mxu0 0.0
    %267 = vmatpush1.msra.mxu0 0.0
    %268 = vmatprep.subr.mxu0 0.0
    %269 = vmatpush1.msra.mxu0 0.0
    %270 = vmatprep.subr.mxu0 0.0
    %271 = vmatpush1.msra.mxu0 0.0
    %272 = vmatprep.subr.mxu0 0.0
    %273 = vmatpush1.msra.mxu0 %v229
    %274 = vmatprep.subr.mxu0 0.0
    %275 = vmatpush1.msra.mxu0 %v228
    %276 = vmatprep.subr.mxu0 0.0
    %277 = vmatpush2.msra.mxu0 0.0
    %278 = vmatprep.subr.mxu0 0.0
    %279 = vmatpush2.msra.mxu0 0.0
    %280 = vmatprep.subr.mxu0 0.0
    %281 = vmatpush2.msra.mxu0 0.0
    %282 = vmatprep.subr.mxu0 0.0
    %283 = vmatpush2.msra.mxu0 0.0
    %284 = vmatprep.subr.mxu0 0.0
    %285 = vmatpush2.msra.mxu0 0.0
    %286 = vmatprep.subr.mxu0 0.0
    %287 = vmatpush2.msra.mxu0 0.0
    %288 = vmatprep.subr.mxu0 0.0
    %289 = vmatpush2.msra.mxu0 0.0
    %290 = vmatprep.subr.mxu0 0.0
    %291 = vmatpush2.msra.mxu0 0.0
    %292 = vmatprep.subr.mxu0 0.0
    %293 = vmatpush2.msra.mxu0 0.0
    %294 = vmatprep.subr.mxu0 0.0
    %295 = vmatpush2.msra.mxu0 0.0
    %296 = vmatprep.subr.mxu0 0.0
    %297 = vmatpush2.msra.mxu0 0.0
    %298 = vmatprep.subr.mxu0 0.0
    %299 = vmatpush2.msra.mxu0 0.0
    %300 = vmatprep.subr.mxu0 0.0
    %301 = vmatpush2.msra.mxu0 0.0
    %302 = vmatprep.subr.mxu0 0.0
    %303 = vmatpush2.msra.mxu0 0.0
    %304 = vmatprep.subr.mxu0 0.0
    %305 = vmatpush2.msra.mxu0 0.0
    %306 = vmatprep.subr.mxu0 0.0
    %307 = vmatpush2.msra.mxu0 0.0
    %308 = vmatprep.mubr.f32.mxu0 0.0
    %309 = vmatmul.mubr.f32.gmra.mxu0 %v242
    %v310 = vpop.f32.mrf.mxu0
    %v311 = vadd.f32 %v240, %v310
    %v312 = vpop.f32.mrf.mxu0
    %313 = vdwg.mxu0
    %v314 = vxor.u32 %v311, 2147483648
    %v315 = vmul.f32 %v314, 1.442695
    %v316 = vpow.pop %v315
    %v317 = vadd.f32 %v316, 1.0
    %v318 = vrcp.pop %v317
    %v319 = vmul.f32 1.0, %v318
    %320 = vst [vmem:[#allocation3] sm:$0x1] %v319
    // Predicated region
    $region30: #{tpu_custom_call.1} parent=1 // pred_check
      _
    $region31: #{tpu_custom_call.1} parent=1 // pred_check_branch
      %322 = sbr.rel (0) target = $region33
    $region32: #{tpu_custom_call.1} parent=1 // pred_region
      %s324 = ssub.s32 16, 16
      %325 = vsyncadd [#allocation4], %s324
      %s327 = sshll.u32 [#allocation3], 4
      %s328 = int_to_ptr.vmem [resolvable:$true] %s327
      %330 = dma.vmem_to_hbm [thread:$0]  %s328, 16, %s7, [#allocation4]
    $region33: #{tpu_custom_call.1} parent=1 // pred_fallthru
      _
    // Predicated region
    $region34: #{tpu_custom_call.1} parent=1 // pred_check
      _
    $region35: #{tpu_custom_call.1} parent=1 // pred_check_branch
      %332 = sbr.rel (0) target = $region37
    $region36: #{tpu_custom_call.1} parent=1 // pred_region
      %333 = dma.done [#allocation4], 16
    $region37: #{tpu_custom_call.1} parent=1 // pred_fallthru
      _
    %334 = vsyncpa [#allocation4], 1

</llo_original>
